<compile_context>
chip_gen: v7x
topology: tpu7x:2x2x1
jax: 0.10.0
libtpu: 0.0.40
codegen_flags: <defaults>
</compile_context>

<pallas_src>
import math
from functools import partial

import jax
import jax.numpy as jnp
from jax.experimental import pallas as pl
from jax.experimental.pallas import tpu as pltpu


_LANE = 128


def _round_up(x, m):
    return (x + m - 1) // m * m


def _sublane_multiple(dtype):
    # f32 -> 8, bf16/f16 -> 16, int8/fp8 -> 32
    return {4: 8, 2: 16, 1: 32}.get(jnp.dtype(dtype).itemsize, 8)


def _make_kernel(approximate_gelu):
    inv_sqrt2 = 1.0 / math.sqrt(2.0)

    def kernel(x_ref, w0_ref, b0_ref, w1_ref, b1_ref, o_ref, acc_ref):
        j = pl.program_id(1)  # hidden-chunk axis (innermost, "arbitrary")

        @pl.when(j == 0)
        def _init():
            acc_ref[...] = jnp.zeros_like(acc_ref)

        x = x_ref[...]
        # linear_0 (this hidden chunk): x @ W0[:, j*th:(j+1)*th] + b0_chunk
        h = jnp.dot(x, w0_ref[...], preferred_element_type=jnp.float32)
        h = h + b0_ref[...].astype(jnp.float32)  # (1, th) broadcasts over rows

        if approximate_gelu:
            # tanh approximation -> transcendental goes to the EUP slot (VPU relief)
            c = jnp.float32(math.sqrt(2.0 / math.pi))
            h = 0.5 * h * (1.0 + jnp.tanh(c * (h + jnp.float32(0.044715) * h * h * h)))
        else:
            # exact GeLU (PyTorch F.gelu default, approximate='none')
            h = 0.5 * h * (1.0 + jax.lax.erf(h * jnp.float32(inv_sqrt2)))

        # dropout(p=0.0) -> identity.
        # Cast back to activation dtype: no-op for f32, keeps MXU at bf16 rate for bf16.
        h = h.astype(x.dtype)

        # linear_1 partial product for this hidden chunk, accumulated in f32.
        acc_ref[...] += jnp.dot(h, w1_ref[...], preferred_element_type=jnp.float32)

        @pl.when(j == pl.num_programs(1) - 1)
        def _finish():
            out = acc_ref[...] + b1_ref[...].astype(jnp.float32)
            o_ref[...] = out.astype(o_ref.dtype)

    return kernel


def prepare_ffn_params(w0, b0, w1, b1):
    """Pad weights ONCE (outside the per-call path).

    w0: [dims, hidden] (already transposed vs. PyTorch's [hidden, dims]), b0: [hidden]
    w1: [hidden, out_dims], b1: [out_dims]
    Hidden / output feature dims are zero-padded to multiples of 128 (lane-dense MXU
    columns and stores).  Zero padding is exact: padded hidden units have bias 0,
    GeLU(0) == 0, and padded rows/cols of the weights contribute nothing.
    """
    dims, hidden = w0.shape
    hidden_w1, out_dims = w1.shape
    assert hidden_w1 == hidden and b0.shape == (hidden,) and b1.shape == (out_dims,)

    hid_p = _round_up(hidden, _LANE)
    out_p = _round_up(out_dims, _LANE)

    if hid_p == hidden:
        w0p, b0p = w0, b0
    else:
        w0p = jnp.zeros((dims, hid_p), w0.dtype).at[:, :hidden].set(w0)
        b0p = jnp.zeros((hid_p,), b0.dtype).at[:hidden].set(b0)
    if hid_p == hidden and out_p == out_dims:
        w1p = w1
    else:
        w1p = jnp.zeros((hid_p, out_p), w1.dtype).at[:hidden, :out_dims].set(w1)
    b1p = b1 if out_p == out_dims else jnp.zeros((out_p,), b1.dtype).at[:out_dims].set(b1)

    return {
        "w0": w0p,
        "b0": b0p.reshape(1, hid_p),
        "w1": w1p,
        "b1": b1p.reshape(1, out_p),
        "dims": dims,
        "hidden": hidden,
        "out_dims": out_dims,
    }


def feed_forward(x, params, *, row_tile=512, hidden_tile=None, approximate_gelu=False):
    """Fused FFN: gelu(x @ w0 + b0) @ w1 + b1, dropout p=0 (identity)."""
    if x.shape[-1] == 0:
        # Matches the PyTorch module: forward() returns x unchanged for empty features.
        return x

    w0, b0, w1, b1 = params["w0"], params["b0"], params["w1"], params["b1"]
    out_dims = params["out_dims"]
    *lead, dims = x.shape
    assert dims == params["dims"], "feature dim mismatch with prepared params"
    hid_p = w0.shape[1]
    out_p = w1.shape[1]

    x2 = x.reshape(-1, dims)
    N = x2.shape[0]
    if N == 0:
        return jnp.zeros((*lead, out_dims), x.dtype)

    itemsize = jnp.dtype(x.dtype).itemsize
    w_item = jnp.dtype(w0.dtype).itemsize
    sub = _sublane_multiple(x.dtype)

    # Generation-aware VMEM sizing (v7x: 64 MiB/TC, v5e/v6e: 128 MiB).
    try:
        vmem_cap = int(getattr(pltpu.get_tpu_info(), "vmem_capacity_bytes", 0)) or (64 << 20)
    except Exception:
        vmem_cap = 64 << 20  # conservative fallback = v7x per-TensorCore
    budget = int(0.60 * vmem_cap)

    def est(rt, th):
        nh = hid_p // th
        wbuf = 1 if nh == 1 else 2  # grid-invariant weights are single-buffered
        w_bytes = wbuf * (dims * th + th * out_p + th + out_p) * w_item
        io_bytes = 2 * rt * (dims + out_p) * itemsize  # double-buffered x / out tiles
        h_bytes = rt * th * 4                           # f32 intermediate of matmul-1
        acc_bytes = rt * out_p * 4                      # f32 accumulator scratch
        return w_bytes + io_bytes + h_bytes + acc_bytes

    # Large row tile (amortizes ~0.35us/grid-step), capped at N, dtype-aware sublane multiple.
    rt_target = max(sub, min(_round_up(row_tile, sub), _round_up(N, sub)))

    if hidden_tile is not None:
        th = int(hidden_tile)
        assert th % _LANE == 0 and hid_p % th == 0, "hidden_tile must be a 128-multiple divisor"
    else:
        th = hid_p

    # Phase A: resident weights; shrink rt (preserving the sublane multiple), not below ~64 rows.
    rt = rt_target
    rt_floor_a = max(sub, min(rt_target, _round_up(64, sub)))
    while est(rt, th) > budget and rt > rt_floor_a:
        rt = max(sub, _round_up(rt // 2, sub))

    # Phase B: K-tile the hidden dim instead of starving the row tile.
    if hidden_tile is None and est(rt, th) > budget and hid_p > _LANE:
        cands = [d for d in range(hid_p - _LANE, 0, -_LANE) if hid_p % d == 0]
        pref = ([d for d in cands if d <= 512 and d % 256 == 0]      # fills v6e/v7x 256-wide MXU
                + [d for d in cands if d <= 512 and d % 256 != 0]
                + [d for d in cands if d > 512])
        for th_c in pref:
            th, rt = th_c, rt_target
            while est(rt, th) > budget and rt > sub:
                rt = max(sub, _round_up(rt // 2, sub))
            if est(rt, th) <= budget:
                break

    nh = hid_p // th
    nr = pl.cdiv(N, rt)  # ragged N: partial last row block, no wrapper-side N padding.

    need = est(rt, th)
    vmem_limit = max(need + (4 << 20),
                     min(int(need * 1.25) + (4 << 20), int(0.75 * vmem_cap)))
    vmem_limit = int(min(vmem_limit, vmem_cap))

    w_mode = dict(pipeline_mode=pl.Buffered(1)) if nh == 1 else {}

    cost = pl.CostEstimate(
        flops=2 * N * (dims * hid_p + hid_p * out_p),
        transcendentals=N * hid_p,
        bytes_accessed=N * (dims + out_p) * itemsize
        + (dims * hid_p + hid_p * out_p + hid_p + out_p) * w_item,
    )

    out = pl.pallas_call(
        _make_kernel(approximate_gelu),
        out_shape=jax.ShapeDtypeStruct((N, out_p), x.dtype),
        grid_spec=pltpu.PrefetchScalarGridSpec(
            num_scalar_prefetch=0,
            grid=(nr, nh),
            in_specs=[
                pl.BlockSpec((rt, dims), lambda i, j: (i, 0)),                 # x tile
                pl.BlockSpec((dims, th), lambda i, j: (0, j), **w_mode),       # W0 chunk
                pl.BlockSpec((1, th), lambda i, j: (0, j), **w_mode),          # b0 chunk
                pl.BlockSpec((th, out_p), lambda i, j: (j, 0), **w_mode),      # W1 chunk
                pl.BlockSpec((1, out_p), lambda i, j: (0, 0),
                             pipeline_mode=pl.Buffered(1)),                    # b1 (constant)
            ],
            out_specs=pl.BlockSpec((rt, out_p), lambda i, j: (i, 0)),
            scratch_shapes=[pltpu.VMEM((rt, out_p), jnp.float32)],             # f32 accumulator
        ),
        compiler_params=pltpu.CompilerParams(
            dimension_semantics=("parallel", "arbitrary"),
            vmem_limit_bytes=vmem_limit,
        ),
        cost_estimate=cost,
    )(x2, w0, b0, w1, b1)

    if out_p != out_dims:
        out = out[:, :out_dims]
    return out.reshape(*lead, out_dims)


def init_linear_params(key, in_features, out_features, dtype=jnp.float32):
    """PyTorch nn.Linear default init: weight, bias ~ U(-1/sqrt(in), 1/sqrt(in)).
    Weight returned already transposed to [in, out]."""
    kw, kb = jax.random.split(key)
    bound = 1.0 / math.sqrt(in_features)
    w = jax.random.uniform(kw, (in_features, out_features), dtype, -bound, bound)
    b = jax.random.uniform(kb, (out_features,), dtype, -bound, bound)
    return w, b


def _reference(x, w0, b0, w1, b1):
    h = x @ w0 + b0
    h = 0.5 * h * (1.0 + jax.lax.erf(h / jnp.sqrt(2.0).astype(h.dtype)))
    return h @ w1 + b1


if __name__ == "__main__":
    key = jax.random.PRNGKey(0)
    kx, k0, k1, kx2, k2, k3, kx3 = jax.random.split(key, 7)

    # Case 1: module defaults -> dims=32, expansion_factor=1.0 (hidden=32), out_dims=32.
    dims, hidden, out_dims = 32, 32, 32
    N = 16
    x = jax.random.normal(kx, (N, dims), jnp.float32)
    w0, b0 = init_linear_params(k0, dims, hidden)
    w1, b1 = init_linear_params(k1, hidden, out_dims)
    params = prepare_ffn_params(w0, b0, w1, b1)

    out = feed_forward(x, params)
    jax.block_until_ready(out)
    ref = _reference(x, w0, b0, w1, b1)
    assert out.shape == (N, out_dims)
    assert jnp.allclose(out, ref, atol=2e-5, rtol=2e-5), "mismatch vs reference (2D)"

    # Case 2: leading batch dims (3, 5) -> 15 flattened rows (ragged vs sublane multiple).
    x3 = jax.random.normal(kx2, (3, 5, dims), jnp.float32)
    out3 = feed_forward(x3, params)
    jax.block_until_ready(out3)
    ref3 = _reference(x3.reshape(-1, dims), w0, b0, w1, b1).reshape(3, 5, out_dims)
    assert out3.shape == (3, 5, out_dims)
    assert jnp.allclose(out3, ref3, atol=2e-5, rtol=2e-5), "mismatch vs reference (3D)"

    # Case 3: exercise the hidden-dim K-tiling (accumulator path), partial last row block,
    # and out_dims padding: dims=64, hidden=256 (2 chunks of 128), out_dims=96, N=45.
    dims3, hidden3, out3d = 64, 256, 96
    xk = jax.random.normal(kx3, (45, dims3), jnp.float32)
    w0k, b0k = init_linear_params(k2, dims3, hidden3)
    w1k, b1k = init_linear_params(k3, hidden3, out3d)
    params_k = prepare_ffn_params(w0k, b0k, w1k, b1k)
    outk = feed_forward(xk, params_k, row_tile=16, hidden_tile=128)
    jax.block_until_ready(outk)
    refk = _reference(xk, w0k, b0k, w1k, b1k)
    assert outk.shape == (45, out3d)
    assert jnp.allclose(outk, refk, atol=1e-4, rtol=1e-4), "mismatch vs reference (K-tiled)"

    print("KERNEL_OK")
</pallas_src>

<mosaic_0001>
module attributes {stable_mosaic.version = 11 : i64} {
  func.func @kernel(%arg0: i32, %arg1: i32, %arg2: memref<16x32xf32, #tpu.memory_space<vmem>>, %arg3: memref<32x128xf32, #tpu.memory_space<vmem>>, %arg4: memref<1x128xf32, #tpu.memory_space<vmem>>, %arg5: memref<128x128xf32, #tpu.memory_space<vmem>>, %arg6: memref<1x128xf32, #tpu.memory_space<vmem>>, %arg7: memref<16x128xf32, #tpu.memory_space<vmem>>, %arg8: memref<16x128xf32, #tpu.memory_space<vmem>>) attributes {dimension_semantics = [#tpu.dimension_semantics<parallel>, #tpu.dimension_semantics<arbitrary>], iteration_bounds = array<i64: 1, 1>, scalar_prefetch = 0 : i64, scratch_operands = 1 : i64, tpu.core_type = #tpu.core_type<tc>, window_params = [{transform_indices = @transform_0, window_bounds = array<i64: 16, 32>}, {pipeline_mode = #tpu.pipeline_mode<synchronous>, transform_indices = @transform_1, window_bounds = array<i64: 32, 128>}, {pipeline_mode = #tpu.pipeline_mode<synchronous>, transform_indices = @transform_2, window_bounds = array<i64: 1, 128>}, {pipeline_mode = #tpu.pipeline_mode<synchronous>, transform_indices = @transform_3, window_bounds = array<i64: 128, 128>}, {pipeline_mode = #tpu.pipeline_mode<synchronous>, transform_indices = @transform_4, window_bounds = array<i64: 1, 128>}, {transform_indices = @transform_5, window_bounds = array<i64: 16, 128>}]} {
    %c0_i32 = arith.constant 0 : i32
    %0 = arith.cmpi eq, %arg1, %c0_i32 : i32
    %1 = arith.extui %0 : i1 to i32
    %c0_i32_0 = arith.constant 0 : i32
    %2 = arith.cmpi ne, %1, %c0_i32_0 : i32
    scf.if %2 {
      %cst_18 = arith.constant 0.000000e+00 : f32
      %25 = vector.broadcast %cst_18 : f32 to vector<16x128xf32>
      %c0_19 = arith.constant 0 : index
      %c0_20 = arith.constant 0 : index
      %26 = vector.load %arg8[%c0_19, %c0_20] : memref<16x128xf32, #tpu.memory_space<vmem>>, vector<16x128xf32>
      tpu.vector_store %arg8[%c0_19, %c0_20], %25 {strides = array<i32>} : memref<16x128xf32, #tpu.memory_space<vmem>>, vector<16x128xf32>,
    } else {
    }
    %c0 = arith.constant 0 : index
    %c0_1 = arith.constant 0 : index
    %3 = vector.load %arg2[%c0, %c0_1] : memref<16x32xf32, #tpu.memory_space<vmem>>, vector<16x32xf32>
    %c0_2 = arith.constant 0 : index
    %c0_3 = arith.constant 0 : index
    %4 = vector.load %arg3[%c0_2, %c0_3] : memref<32x128xf32, #tpu.memory_space<vmem>>, vector<32x128xf32>
    %cst = arith.constant dense<0.000000e+00> : vector<16x128xf32>
    %5 = tpu.matmul %3, %4, %cst {dimension_numbers = #tpu.dot_dimension_numbers<[1], [0], [0], [1], [0, 0, 1, 1], [], []>} : vector<16x32xf32>, vector<32x128xf32>, vector<16x128xf32> -> vector<16x128xf32>
    %c0_4 = arith.constant 0 : index
    %c0_5 = arith.constant 0 : index
    %6 = vector.load %arg4[%c0_4, %c0_5] : memref<1x128xf32, #tpu.memory_space<vmem>>, vector<1x128xf32>
    %7 = vector.broadcast %6 : vector<1x128xf32> to vector<16x128xf32>
    %8 = arith.addf %5, %7 : vector<16x128xf32>
    %cst_6 = arith.constant 5.000000e-01 : f32
    %9 = vector.broadcast %cst_6 : f32 to vector<16x128xf32>
    %10 = arith.mulf %9, %8 : vector<16x128xf32>
    %cst_7 = arith.constant 0.707106769 : f32
    %11 = vector.broadcast %cst_7 : f32 to vector<16x128xf32>
    %12 = arith.mulf %8, %11 : vector<16x128xf32>
    %13 = math.erf %12 : vector<16x128xf32>
    %cst_8 = arith.constant 1.000000e+00 : f32
    %14 = vector.broadcast %cst_8 : f32 to vector<16x128xf32>
    %15 = arith.addf %14, %13 : vector<16x128xf32>
    %16 = arith.mulf %10, %15 : vector<16x128xf32>
    %c0_9 = arith.constant 0 : index
    %c0_10 = arith.constant 0 : index
    %17 = vector.load %arg8[%c0_9, %c0_10] : memref<16x128xf32, #tpu.memory_space<vmem>>, vector<16x128xf32>
    %c0_11 = arith.constant 0 : index
    %c0_12 = arith.constant 0 : index
    %18 = vector.load %arg5[%c0_11, %c0_12] : memref<128x128xf32, #tpu.memory_space<vmem>>, vector<128x128xf32>
    %cst_13 = arith.constant dense<0.000000e+00> : vector<16x128xf32>
    %19 = tpu.matmul %16, %18, %cst_13 {dimension_numbers = #tpu.dot_dimension_numbers<[1], [0], [0], [1], [0, 0, 1, 1], [], []>} : vector<16x128xf32>, vector<128x128xf32>, vector<16x128xf32> -> vector<16x128xf32>
    %20 = arith.addf %17, %19 : vector<16x128xf32>
    %c0_14 = arith.constant 0 : index
    %c0_15 = arith.constant 0 : index
    %21 = vector.load %arg8[%c0_14, %c0_15] : memref<16x128xf32, #tpu.memory_space<vmem>>, vector<16x128xf32>
    tpu.vector_store %arg8[%c0_14, %c0_15], %20 {strides = array<i32>} : memref<16x128xf32, #tpu.memory_space<vmem>>, vector<16x128xf32>,
    %c0_i32_16 = arith.constant 0 : i32
    %22 = arith.cmpi eq, %arg1, %c0_i32_16 : i32
    %23 = arith.extui %22 : i1 to i32
    %c0_i32_17 = arith.constant 0 : i32
    %24 = arith.cmpi ne, %23, %c0_i32_17 : i32
    scf.if %24 {
      %c0_18 = arith.constant 0 : index
      %c0_19 = arith.constant 0 : index
      %25 = vector.load %arg8[%c0_18, %c0_19] : memref<16x128xf32, #tpu.memory_space<vmem>>, vector<16x128xf32>
      %c0_20 = arith.constant 0 : index
      %c0_21 = arith.constant 0 : index
      %26 = vector.load %arg6[%c0_20, %c0_21] : memref<1x128xf32, #tpu.memory_space<vmem>>, vector<1x128xf32>
      %27 = vector.broadcast %26 : vector<1x128xf32> to vector<16x128xf32>
      %28 = arith.addf %25, %27 : vector<16x128xf32>
      %c0_22 = arith.constant 0 : index
      %c0_23 = arith.constant 0 : index
      %29 = vector.load %arg7[%c0_22, %c0_23] : memref<16x128xf32, #tpu.memory_space<vmem>>, vector<16x128xf32>
      tpu.vector_store %arg7[%c0_22, %c0_23], %28 {strides = array<i32>} : memref<16x128xf32, #tpu.memory_space<vmem>>, vector<16x128xf32>,
    } else {
    }
    return
  }
  func.func @transform_0(%arg0: i32, %arg1: i32) -> (i32, i32) {
    %c0_i32 = arith.constant 0 : i32
    %c0_i32_0 = arith.constant 0 : i32
    return %arg0, %c0_i32 : i32, i32
  }
  func.func @transform_1(%arg0: i32, %arg1: i32) -> (i32, i32) {
    %c0_i32 = arith.constant 0 : i32
    %c0_i32_0 = arith.constant 0 : i32
    return %c0_i32, %arg1 : i32, i32
  }
  func.func @transform_2(%arg0: i32, %arg1: i32) -> (i32, i32) {
    %c0_i32 = arith.constant 0 : i32
    %c0_i32_0 = arith.constant 0 : i32
    return %c0_i32, %arg1 : i32, i32
  }
  func.func @transform_3(%arg0: i32, %arg1: i32) -> (i32, i32) {
    %c0_i32 = arith.constant 0 : i32
    %c0_i32_0 = arith.constant 0 : i32
    return %arg1, %c0_i32 : i32, i32
  }
  func.func @transform_4(%arg0: i32, %arg1: i32) -> (i32, i32) {
    %c0_i32 = arith.constant 0 : i32
    %c0_i32_0 = arith.constant 0 : i32
    %c0_i32_1 = arith.constant 0 : i32
    return %c0_i32, %c0_i32_0 : i32, i32
  }
  func.func @transform_5(%arg0: i32, %arg1: i32) -> (i32, i32) {
    %c0_i32 = arith.constant 0 : i32
    %c0_i32_0 = arith.constant 0 : i32
    return %arg0, %c0_i32 : i32, i32
  }
}

</mosaic_0001>

<llo_original>
// kernel: tpu_custom_call.1
$region0: #{tpu_custom_call.1}
  #allocation0 [shape = 'u32[]', space=smem, size = 0x4, offset = 0x4, fixed_abs, tag = 'smem constant byte address 0x4 - core index']
  #allocation1 [shape = 'u32[144,128]{1,0:T(1,128)}', space=vmem, size = 0x12000, scoped, tag = 'internal scratch']
  #allocation2 [shape = 'f32[16,128]{1,0:T(8,128)}', space=vmem, size = 0x2000, scoped, tag = 'scratch operand']
  %s0 = inlined_call_operand.hbm [shape: f32[16,32], index: 0, kind: input, shape index: {}]
  %s1 = inlined_call_operand.hbm [shape: f32[32,128], index: 1, kind: input, shape index: {}]
  %s2 = inlined_call_operand.vmem [shape: f32[1,128], index: 2, kind: input, shape index: {}]
  %s3 = inlined_call_operand.hbm [shape: f32[128,128], index: 3, kind: input, shape index: {}]
  %s4 = inlined_call_operand.vmem [shape: f32[1,128], index: 4, kind: input, shape index: {}]
  %s5 = inlined_call_operand.hbm [shape: f32[16,128], index: 5, kind: output, shape index: {}]
  %s6 = sld [smem:[#allocation0]]
  $region50: #{tpu_custom_call.1} parent=0
    _
  %s8 = ssub.s32 1, %s6
  %s9 = scalar_select 0, %s8, %s6
  $region1: #{tpu_custom_call.1} parent=0
    #allocation3 [shape = 'u8[8192]{0}', space=vmem, size = 0x2000, scoped, tag = 'input window, operand 0, single buffered']
    #allocation4 [shape = 's32[1]{0}', space=sflag, size = 0x4, scoped, tag = 'scoped memory for tpu_custom_call.1']
    #allocation5 [shape = 's32[1]{0}', space=sflag, size = 0x4, scoped, tag = 'scoped memory for tpu_custom_call.1']
    #allocation6 [shape = 'u8[16384]{0}', space=vmem, size = 0x4000, scoped, tag = 'input window, operand 1, single buffered']
    #allocation7 [shape = 's32[1]{0}', space=sflag, size = 0x4, scoped, tag = 'scoped memory for tpu_custom_call.1']
    #allocation8 [shape = 'u8[65536]{0}', space=vmem, size = 0x10000, scoped, tag = 'input window, operand 3, single buffered']
    #allocation9 [shape = 'u8[8192]{0}', space=vmem, size = 0x2000, scoped, tag = 'output window, operand 0, single buffered']
    %10 = vsyncpa [#allocation4], 0
    %11 = vsyncpa [#allocation7], 0
    %12 = vsyncpa [#allocation5], 0
    // Predicated region
    $region2: #{tpu_custom_call.1} parent=1 // pred_check
      _
    $region3: #{tpu_custom_call.1} parent=1 // pred_check_branch
      %14 = sbr.rel (0) target = $region5
    $region4: #{tpu_custom_call.1} parent=1 // pred_region
      %s16 = ssub.s32 256, 256
      %17 = vsyncadd [#allocation4], %s16
      %s18 = sshll.u32 [#allocation3], 4
      %s19 = int_to_ptr.vmem [resolvable:$true] %s18
      %24 = dma.hbm_to_vmem [thread:$0]  %s0, 256, %s19, [#allocation4], 128, 128, 8
    $region5: #{tpu_custom_call.1} parent=1 // pred_fallthru
      _
    // Predicated region
    $region6: #{tpu_custom_call.1} parent=1 // pred_check
      _
    $region7: #{tpu_custom_call.1} parent=1 // pred_check_branch
      %26 = sbr.rel (0) target = $region9
    $region8: #{tpu_custom_call.1} parent=1 // pred_region
      %s28 = ssub.s32 512, 512
      %29 = vsyncadd [#allocation7], %s28
      %s30 = sshll.u32 [#allocation6], 4
      %s31 = int_to_ptr.vmem [resolvable:$true] %s30
      %36 = dma.hbm_to_vmem [thread:$0]  %s1, 512, %s31, [#allocation7], 128, 128, 8
    $region9: #{tpu_custom_call.1} parent=1 // pred_fallthru
      _
    // Predicated region
    $region10: #{tpu_custom_call.1} parent=1 // pred_check
      _
    $region11: #{tpu_custom_call.1} parent=1 // pred_check_branch
      %38 = sbr.rel (0) target = $region13
    $region12: #{tpu_custom_call.1} parent=1 // pred_region
      _
    $region13: #{tpu_custom_call.1} parent=1 // pred_fallthru
      _
    // Predicated region
    $region14: #{tpu_custom_call.1} parent=1 // pred_check
      _
    $region15: #{tpu_custom_call.1} parent=1 // pred_check_branch
      %40 = sbr.rel (0) target = $region17
    $region16: #{tpu_custom_call.1} parent=1 // pred_region
      %s42 = ssub.s32 2048, 2048
      %43 = vsyncadd [#allocation7], %s42
      %s44 = sshll.u32 [#allocation8], 4
      %s45 = int_to_ptr.vmem [resolvable:$true] %s44
      %50 = dma.hbm_to_vmem [thread:$0]  %s3, 2048, %s45, [#allocation7], 128, 128, 8
    $region17: #{tpu_custom_call.1} parent=1 // pred_fallthru
      _
    // Predicated region
    $region18: #{tpu_custom_call.1} parent=1 // pred_check
      _
    $region19: #{tpu_custom_call.1} parent=1 // pred_check_branch
      %52 = sbr.rel (0) target = $region21
    $region20: #{tpu_custom_call.1} parent=1 // pred_region
      _
    $region21: #{tpu_custom_call.1} parent=1 // pred_fallthru
      _
    // Predicated region
    $region22: #{tpu_custom_call.1} parent=1 // pred_check
      _
    $region23: #{tpu_custom_call.1} parent=1 // pred_check_branch
      %54 = sbr.rel (0) target = $region25
    $region24: #{tpu_custom_call.1} parent=1 // pred_region
      %55 = dma.done [#allocation4], 256
    $region25: #{tpu_custom_call.1} parent=1 // pred_fallthru
      _
    // Predicated region
    $region26: #{tpu_custom_call.1} parent=1 // pred_check
      _
    $region27: #{tpu_custom_call.1} parent=1 // pred_check_branch
      %57 = sbr.rel (0) target = $region29
    $region28: #{tpu_custom_call.1} parent=1 // pred_region
      %58 = dma.done [#allocation7], 512
    $region29: #{tpu_custom_call.1} parent=1 // pred_fallthru
      _
    // Predicated region
    $region30: #{tpu_custom_call.1} parent=1 // pred_check
      _
    $region31: #{tpu_custom_call.1} parent=1 // pred_check_branch
      %60 = sbr.rel (0) target = $region33
    $region32: #{tpu_custom_call.1} parent=1 // pred_region
      %61 = dma.done [#allocation7], 2048
    $region33: #{tpu_custom_call.1} parent=1 // pred_fallthru
      _
    %p62 = scmp.eq.s32.totalorder 0, 0
    // Predicated region
    $region34: #{tpu_custom_call.1} parent=1 // pred_check
      %p63 = pneg %p62
    $region35: #{tpu_custom_call.1} parent=1 // pred_check_branch
      %65 = sbr.rel (%p63) target = $region37
    $region36: #{tpu_custom_call.1} parent=1 // pred_region
      %66 = vst [vmem:[#allocation2] sm:$0xff] 0.0
      %67 = vst [vmem:[#allocation2 + $0x8] sm:$0xff] 0.0
    $region37: #{tpu_custom_call.1} parent=1 // pred_fallthru
      _
    %v68 = vld [vmem:[#allocation3] sm:$0xff]
    %v69 = vld [vmem:[#allocation3 + $0x8] sm:$0xff]
    %v70 = vld [vmem:[#allocation6] sm:$0xff]
    %v71 = vld [vmem:[#allocation6 + $0x8] sm:$0xff]
    %v72 = vld [vmem:[#allocation6 + $0x10] sm:$0xff]
    %v73 = vld [vmem:[#allocation6 + $0x18] sm:$0xff]
    %v74 = vld [vmem:[%s2] sm:$0x1]
    %v76 = vlaneseq
    %v77 = vshrl.u32 %v76, 7
    %v78 = vsub.s32 0, %v77
    %v79 = vrot.slane %v74, %v78
    %vm81 = vcmask 261120
    %v83 = vsel %vm81, %v68, 0
    %v86 = vsel %vm81, %v69, 0
    %88 = vmatprep.subr.mxu0 0.0
    %89 = vmatpush1.msra.mxu0 %v70
    %90 = vmatprep.subr.mxu0 0.0
    %91 = vmatpush1.msra.mxu0 %v71
    %92 = vmatprep.subr.mxu0 0.0
    %93 = vmatpush1.msra.mxu0 %v72
    %94 = vmatprep.subr.mxu0 0.0
    %95 = vmatpush1.msra.mxu0 %v73
    %96 = vmatprep.subr.mxu0 0.0
    %97 = vmatpush1.msra.mxu0 0.0
    %98 = vmatprep.subr.mxu0 0.0
    %99 = vmatpush1.msra.mxu0 0.0
    %100 = vmatprep.subr.mxu0 0.0
    %101 = vmatpush1.msra.mxu0 0.0
    %102 = vmatprep.subr.mxu0 0.0
    %103 = vmatpush1.msra.mxu0 0.0
    %104 = vmatprep.subr.mxu0 0.0
    %105 = vmatpush1.msra.mxu0 0.0
    %106 = vmatprep.subr.mxu0 0.0
    %107 = vmatpush1.msra.mxu0 0.0
    %108 = vmatprep.subr.mxu0 0.0
    %109 = vmatpush1.msra.mxu0 0.0
    %110 = vmatprep.subr.mxu0 0.0
    %111 = vmatpush1.msra.mxu0 0.0
    %112 = vmatprep.subr.mxu0 0.0
    %113 = vmatpush1.msra.mxu0 0.0
    %114 = vmatprep.subr.mxu0 0.0
    %115 = vmatpush1.msra.mxu0 0.0
    %116 = vmatprep.subr.mxu0 0.0
    %117 = vmatpush1.msra.mxu0 0.0
    %118 = vmatprep.subr.mxu0 0.0
    %119 = vmatpush1.msra.mxu0 0.0
    %120 = vmatprep.subr.mxu0 0.0
    %121 = vmatpush1.msra.mxu0 0.0
    %122 = vmatprep.subr.mxu0 0.0
    %123 = vmatpush1.msra.mxu0 0.0
    %124 = vmatprep.subr.mxu0 0.0
    %125 = vmatpush1.msra.mxu0 0.0
    %126 = vmatprep.subr.mxu0 0.0
    %127 = vmatpush1.msra.mxu0 0.0
    %128 = vmatprep.subr.mxu0 0.0
    %129 = vmatpush1.msra.mxu0 0.0
    %130 = vmatprep.subr.mxu0 0.0
    %131 = vmatpush1.msra.mxu0 0.0
    %132 = vmatprep.subr.mxu0 0.0
    %133 = vmatpush1.msra.mxu0 0.0
    %134 = vmatprep.subr.mxu0 0.0
    %135 = vmatpush1.msra.mxu0 0.0
    %136 = vmatprep.subr.mxu0 0.0
    %137 = vmatpush1.msra.mxu0 0.0
    %138 = vmatprep.subr.mxu0 0.0
    %139 = vmatpush1.msra.mxu0 0.0
    %140 = vmatprep.subr.mxu0 0.0
    %141 = vmatpush1.msra.mxu0 0.0
    %142 = vmatprep.subr.mxu0 0.0
    %143 = vmatpush1.msra.mxu0 0.0
    %144 = vmatprep.subr.mxu0 0.0
    %145 = vmatpush1.msra.mxu0 0.0
    %146 = vmatprep.subr.mxu0 0.0
    %147 = vmatpush1.msra.mxu0 0.0
    %148 = vmatprep.subr.mxu0 0.0
    %149 = vmatpush1.msra.mxu0 0.0
    %150 = vmatprep.subr.mxu0 0.0
    %151 = vmatpush1.msra.mxu0 0.0
    %152 = vmatprep.mubr.f32.mxu0 0.0
    %153 = vmatmul.mubr.f32.gmra.mrb[0].mxu0 %v83
    %v154 = vpop.f32.mrb[0].mxu0
    %v155 = vadd.f32 %v79, %v154
    %v156 = vpop.f32.mrb[0].mxu0
    %157 = vmatprep.mubr.f32.mxu0 0.0
    %158 = vmatmul.mubr.f32.gmra.mrb[0].mxu0 %v86
    %v159 = vpop.f32.mrb[0].mxu0
    %v160 = vadd.f32 %v79, %v159
    %v161 = vpop.f32.mrb[0].mxu0
    %162 = vdwg.mxu0
    %v163 = vmul.f32 %v155, 0.5
    %v164 = vmul.f32 %v160, 0.5
    %v165 = vmul.f32 %v155, 0.70710677
    %v166 = vmul.f32 %v160, 0.70710677
    %v167 = verf.f32.pop %v165
    %v168 = verf.f32.pop %v166
    %v169 = vadd.f32 %v167, 1.0
    %v170 = vadd.f32 %v168, 1.0
    %v171 = vmul.f32 %v163, %v169
    %v172 = vmul.f32 %v164, %v170
    %v173 = vld [vmem:[#allocation2] sm:$0xff]
    %v174 = vld [vmem:[#allocation2 + $0x8] sm:$0xff]
    %v175 = vld [vmem:[#allocation8] sm:$0xff]
    %v176 = vld [vmem:[#allocation8 + $0x8] sm:$0xff]
    %v177 = vld [vmem:[#allocation8 + $0x10] sm:$0xff]
    %v178 = vld [vmem:[#allocation8 + $0x18] sm:$0xff]
    %v179 = vld [vmem:[#allocation8 + $0x20] sm:$0xff]
    %v180 = vld [vmem:[#allocation8 + $0x28] sm:$0xff]
    %v181 = vld [vmem:[#allocation8 + $0x30] sm:$0xff]
    %v182 = vld [vmem:[#allocation8 + $0x38] sm:$0xff]
    %v183 = vld [vmem:[#allocation8 + $0x40] sm:$0xff]
    %v184 = vld [vmem:[#allocation8 + $0x48] sm:$0xff]
    %v185 = vld [vmem:[#allocation8 + $0x50] sm:$0xff]
    %v186 = vld [vmem:[#allocation8 + $0x58] sm:$0xff]
    %v187 = vld [vmem:[#allocation8 + $0x60] sm:$0xff]
    %v188 = vld [vmem:[#allocation8 + $0x68] sm:$0xff]
    %v189 = vld [vmem:[#allocation8 + $0x70] sm:$0xff]
    %v190 = vld [vmem:[#allocation8 + $0x78] sm:$0xff]
    %191 = vmatprep.subr.mxu0 0.0
    %192 = vmatpush1.msra.mxu0 %v175
    %193 = vmatprep.subr.mxu0 0.0
    %194 = vmatpush1.msra.mxu0 %v176
    %195 = vmatprep.subr.mxu0 0.0
    %196 = vmatpush1.msra.mxu0 %v177
    %197 = vmatprep.subr.mxu0 0.0
    %198 = vmatpush1.msra.mxu0 %v178
    %199 = vmatprep.subr.mxu0 0.0
    %200 = vmatpush1.msra.mxu0 %v179
    %201 = vmatprep.subr.mxu0 0.0
    %202 = vmatpush1.msra.mxu0 %v180
    %203 = vmatprep.subr.mxu0 0.0
    %204 = vmatpush1.msra.mxu0 %v181
    %205 = vmatprep.subr.mxu0 0.0
    %206 = vmatpush1.msra.mxu0 %v182
    %207 = vmatprep.subr.mxu0 0.0
    %208 = vmatpush1.msra.mxu0 %v183
    %209 = vmatprep.subr.mxu0 0.0
    %210 = vmatpush1.msra.mxu0 %v184
    %211 = vmatprep.subr.mxu0 0.0
    %212 = vmatpush1.msra.mxu0 %v185
    %213 = vmatprep.subr.mxu0 0.0
    %214 = vmatpush1.msra.mxu0 %v186
    %215 = vmatprep.subr.mxu0 0.0
    %216 = vmatpush1.msra.mxu0 %v187
    %217 = vmatprep.subr.mxu0 0.0
    %218 = vmatpush1.msra.mxu0 %v188
    %219 = vmatprep.subr.mxu0 0.0
    %220 = vmatpush1.msra.mxu0 %v189
    %221 = vmatprep.subr.mxu0 0.0
    %222 = vmatpush1.msra.mxu0 %v190
    %223 = vmatprep.subr.mxu0 0.0
    %224 = vmatpush1.msra.mxu0 0.0
    %225 = vmatprep.subr.mxu0 0.0
    %226 = vmatpush1.msra.mxu0 0.0
    %227 = vmatprep.subr.mxu0 0.0
    %228 = vmatpush1.msra.mxu0 0.0
    %229 = vmatprep.subr.mxu0 0.0
    %230 = vmatpush1.msra.mxu0 0.0
    %231 = vmatprep.subr.mxu0 0.0
    %232 = vmatpush1.msra.mxu0 0.0
    %233 = vmatprep.subr.mxu0 0.0
    %234 = vmatpush1.msra.mxu0 0.0
    %235 = vmatprep.subr.mxu0 0.0
    %236 = vmatpush1.msra.mxu0 0.0
    %237 = vmatprep.subr.mxu0 0.0
    %238 = vmatpush1.msra.mxu0 0.0
    %239 = vmatprep.subr.mxu0 0.0
    %240 = vmatpush1.msra.mxu0 0.0
    %241 = vmatprep.subr.mxu0 0.0
    %242 = vmatpush1.msra.mxu0 0.0
    %243 = vmatprep.subr.mxu0 0.0
    %244 = vmatpush1.msra.mxu0 0.0
    %245 = vmatprep.subr.mxu0 0.0
    %246 = vmatpush1.msra.mxu0 0.0
    %247 = vmatprep.subr.mxu0 0.0
    %248 = vmatpush1.msra.mxu0 0.0
    %249 = vmatprep.subr.mxu0 0.0
    %250 = vmatpush1.msra.mxu0 0.0
    %251 = vmatprep.subr.mxu0 0.0
    %252 = vmatpush1.msra.mxu0 0.0
    %253 = vmatprep.subr.mxu0 0.0
    %254 = vmatpush1.msra.mxu0 0.0
    %255 = vmatprep.mubr.f32.mxu0 0.0
    %256 = vmatmul.mubr.f32.gmra.mrb[0].mxu0 %v171
    %v257 = vpop.f32.mrb[0].mxu0
    %v258 = vadd.f32 0.0, %v257
    %v259 = vpop.f32.mrb[0].mxu0
    %260 = vmatprep.mubr.f32.mxu0 0.0
    %261 = vmatmul.mubr.f32.gmra.mrb[0].mxu0 %v172
    %v262 = vpop.f32.mrb[0].mxu0
    %v263 = vadd.f32 0.0, %v262
    %v264 = vpop.f32.mrb[0].mxu0
    %265 = vdwg.mxu0
    %v266 = vadd.f32 %v173, %v258
    %v267 = vadd.f32 %v174, %v263
    %268 = vst [vmem:[#allocation2] sm:$0xff] %v266
    %269 = vst [vmem:[#allocation2 + $0x8] sm:$0xff] %v267
    // Predicated region
    $region38: #{tpu_custom_call.1} parent=1 // pred_check
      %p270 = pneg %p62
    $region39: #{tpu_custom_call.1} parent=1 // pred_check_branch
      %272 = sbr.rel (%p270) target = $region41
    $region40: #{tpu_custom_call.1} parent=1 // pred_region
      %v273 = vld [vmem:[#allocation2] sm:$0xff]
      %v274 = vld [vmem:[#allocation2 + $0x8] sm:$0xff]
      %v275 = vld [vmem:[%s4] sm:$0x1]
      %v277 = vlaneseq
      %v278 = vshrl.u32 %v277, 7
      %v279 = vsub.s32 0, %v278
      %v280 = vrot.slane %v275, %v279
      %v282 = vadd.f32 %v273, %v280
      %v283 = vadd.f32 %v274, %v280
      %284 = vst [vmem:[#allocation9] sm:$0xff] %v282
      %285 = vst [vmem:[#allocation9 + $0x8] sm:$0xff] %v283
    $region41: #{tpu_custom_call.1} parent=1 // pred_fallthru
      _
    // Predicated region
    $region42: #{tpu_custom_call.1} parent=1 // pred_check
      _
    $region43: #{tpu_custom_call.1} parent=1 // pred_check_branch
      %287 = sbr.rel (0) target = $region45
    $region44: #{tpu_custom_call.1} parent=1 // pred_region
      %s289 = ssub.s32 256, 256
      %290 = vsyncadd [#allocation5], %s289
      %s291 = sshll.u32 [#allocation9], 4
      %s292 = int_to_ptr.vmem [resolvable:$true] %s291
      %297 = dma.vmem_to_hbm [thread:$0]  %s292, 256, %s5, [#allocation5], 128, 128, 8
    $region45: #{tpu_custom_call.1} parent=1 // pred_fallthru
      _
    // Predicated region
    $region46: #{tpu_custom_call.1} parent=1 // pred_check
      _
    $region47: #{tpu_custom_call.1} parent=1 // pred_check_branch
      %299 = sbr.rel (0) target = $region49
    $region48: #{tpu_custom_call.1} parent=1 // pred_region
      %300 = dma.done [#allocation5], 256
    $region49: #{tpu_custom_call.1} parent=1 // pred_fallthru
      _
    %301 = vsyncpa [#allocation4], 1
    %302 = vsyncpa [#allocation7], 1
    %303 = vsyncpa [#allocation5], 1

</llo_original>
